<compile_context>
chip_gen: v6e
topology: v6e:2x2x1
jax: 0.10.0
libtpu: 0.0.40
codegen_flags: <defaults>
</compile_context>

<pallas_src>
import jax
import jax.numpy as jnp
from jax.experimental import pallas as pl
from jax.experimental.pallas import tpu as pltpu


# ---------------------------------------------------------------------------
# Kernels
# ---------------------------------------------------------------------------
def _fused_qkv_kernel(x_ref, wq_ref, wkv_ref, bq_ref, bkv_ref, q_ref, kv_ref):
    # x_ref: (tm, C); wq_ref: (C, inner); wkv_ref: (C, 2*inner)
    # bq_ref: (1, inner) f32; bkv_ref: (1, 2*inner) f32
    x = x_ref[...]
    acc_q = jnp.dot(x, wq_ref[...], preferred_element_type=jnp.float32)
    q_ref[...] = (acc_q + bq_ref[...]).astype(q_ref.dtype)
    acc_kv = jnp.dot(x, wkv_ref[...], preferred_element_type=jnp.float32)
    kv_ref[...] = (acc_kv + bkv_ref[...]).astype(kv_ref.dtype)


def _linear_kernel(x_ref, w_ref, b_ref, o_ref):
    acc = jnp.dot(x_ref[...], w_ref[...], preferred_element_type=jnp.float32)
    o_ref[...] = (acc + b_ref[...]).astype(o_ref.dtype)


# ---------------------------------------------------------------------------
# Tiling helpers
# ---------------------------------------------------------------------------
def _padded_bytes(rows, cols, dtype):
    r = -(-rows // 8) * 8
    c = -(-cols // 128) * 128
    return r * c * jnp.dtype(dtype).itemsize


def _pick_row_tile(M, per_row_pipelined_bytes):
    """Pick the largest row tile whose *double-buffered* pipelined footprint
    (x tile + output tiles) stays under a conservative budget, so the pipeline
    fits on v7x (64 MiB physical VMEM) with the resident weights on top."""
    if M <= 512:
        return M
    budget = 12 << 20  # per-buffer budget; x2 for double buffering stays < 24 MiB
    for tm in (1024, 512, 256, 128):
        if 2 * tm * per_row_pipelined_bytes <= budget and (M % tm == 0 or tm <= M):
            # prefer a tile that divides M; otherwise Pallas masks the edge block
            if M % tm == 0:
                return tm
    for tm in (512, 256, 128):
        if 2 * tm * per_row_pipelined_bytes <= budget:
            return tm
    return 128


def _vmem_limit(tile_shapes_dtypes):
    # Everything x2 (double buffering) + headroom; clamp to stay inside v7x's
    # 64 MiB physical VMEM while still raising the default when needed.
    total = sum(_padded_bytes(r, c, dt) for (r, c), dt in tile_shapes_dtypes)
    budget = 2 * total + (2 << 20)
    return int(min(max(budget, 16 << 20), 60 << 20))


# ---------------------------------------------------------------------------
# pallas_call wrappers
# ---------------------------------------------------------------------------
def fused_qkv_projection(x2d, wq, bq, wkv, bkv, *, compute_dtype=None):
    """x2d: (M, C); wq: (C, inner); wkv: (C, 2*inner) -> (M, inner), (M, 2*inner)."""
    M, C = x2d.shape
    inner = wq.shape[1]
    inner2 = wkv.shape[1]
    out_dtype = x2d.dtype

    if compute_dtype is not None:
        x2d = x2d.astype(compute_dtype)
        wq = wq.astype(compute_dtype)
        wkv = wkv.astype(compute_dtype)

    bq2 = bq.reshape(1, inner).astype(jnp.float32)
    bkv2 = bkv.reshape(1, inner2).astype(jnp.float32)

    per_row_bytes = (C * jnp.dtype(x2d.dtype).itemsize
                     + (inner + inner2) * jnp.dtype(out_dtype).itemsize)
    tm = _pick_row_tile(M, per_row_bytes)
    grid = (pl.cdiv(M, tm),)

    vmem_limit = _vmem_limit([
        ((tm, C), x2d.dtype),
        ((C, inner), wq.dtype),
        ((C, inner2), wkv.dtype),
        ((1, inner), jnp.float32),
        ((1, inner2), jnp.float32),
        ((tm, inner), out_dtype),
        ((tm, inner2), out_dtype),
    ])

    q_flat, kv_flat = pl.pallas_call(
        _fused_qkv_kernel,
        out_shape=(
            jax.ShapeDtypeStruct((M, inner), out_dtype),
            jax.ShapeDtypeStruct((M, inner2), out_dtype),
        ),
        grid_spec=pltpu.PrefetchScalarGridSpec(
            num_scalar_prefetch=0,
            grid=grid,
            in_specs=[
                pl.BlockSpec((tm, C), lambda i: (i, 0)),       # x tile (pipelined)
                pl.BlockSpec((C, inner), lambda i: (0, 0)),    # Wq (resident)
                pl.BlockSpec((C, inner2), lambda i: (0, 0)),   # Wkv (resident)
                pl.BlockSpec((1, inner), lambda i: (0, 0)),    # bq (resident)
                pl.BlockSpec((1, inner2), lambda i: (0, 0)),   # bkv (resident)
            ],
            out_specs=(
                pl.BlockSpec((tm, inner), lambda i: (i, 0)),
                pl.BlockSpec((tm, inner2), lambda i: (i, 0)),
            ),
        ),
        compiler_params=pltpu.CompilerParams(
            dimension_semantics=("parallel",),
            vmem_limit_bytes=vmem_limit,
        ),
    )(x2d, wq, wkv, bq2, bkv2)
    return q_flat, kv_flat


def linear_projection(x2d, w, b, *, compute_dtype=None):
    """x2d: (M, C); w: (C, Nout); b: (Nout,) -> (M, Nout).  Used for the
    cross-attention path (q from x, kv from attn_kv)."""
    M, C = x2d.shape
    Nout = w.shape[1]
    out_dtype = x2d.dtype

    if compute_dtype is not None:
        x2d = x2d.astype(compute_dtype)
        w = w.astype(compute_dtype)

    b2 = b.reshape(1, Nout).astype(jnp.float32)

    per_row_bytes = (C * jnp.dtype(x2d.dtype).itemsize
                     + Nout * jnp.dtype(out_dtype).itemsize)
    tm = _pick_row_tile(M, per_row_bytes)
    grid = (pl.cdiv(M, tm),)

    vmem_limit = _vmem_limit([
        ((tm, C), x2d.dtype),
        ((C, Nout), w.dtype),
        ((1, Nout), jnp.float32),
        ((tm, Nout), out_dtype),
    ])

    return pl.pallas_call(
        _linear_kernel,
        out_shape=jax.ShapeDtypeStruct((M, Nout), out_dtype),
        grid_spec=pltpu.PrefetchScalarGridSpec(
            num_scalar_prefetch=0,
            grid=grid,
            in_specs=[
                pl.BlockSpec((tm, C), lambda i: (i, 0)),
                pl.BlockSpec((C, Nout), lambda i: (0, 0)),
                pl.BlockSpec((1, Nout), lambda i: (0, 0)),
            ],
            out_specs=pl.BlockSpec((tm, Nout), lambda i: (i, 0)),
        ),
        compiler_params=pltpu.CompilerParams(
            dimension_semantics=("parallel",),
            vmem_limit_bytes=vmem_limit,
        ),
    )(x2d, w, b2)


# ---------------------------------------------------------------------------
# Module wrapper
# ---------------------------------------------------------------------------
class LinearProjectionPallas:
    """JAX/Pallas equivalent of the PyTorch LinearProjection module."""

    def __init__(self, dim, heads=8, dim_head=64, bias=True, key=None,
                 dtype=jnp.float32, compute_dtype=None):
        inner_dim = dim_head * heads
        self.dim = dim
        self.heads = heads
        self.inner_dim = inner_dim
        self.bias = bias
        self.compute_dtype = compute_dtype  # e.g. jnp.bfloat16 on v5e/v6e/v7x

        if key is None:
            key = jax.random.PRNGKey(0)
        k1, k2, k3, k4 = jax.random.split(key, 4)
        # nn.Linear default init: U(-1/sqrt(fan_in), 1/sqrt(fan_in)); weight (out, in).
        bound = 1.0 / (dim ** 0.5)
        # PyTorch weights are (out, in); store transposed as (in, out) for x @ W.
        self.wq = jax.random.uniform(k1, (dim, inner_dim), dtype, -bound, bound)
        self.wkv = jax.random.uniform(k2, (dim, inner_dim * 2), dtype, -bound, bound)
        if bias:
            self.bq = jax.random.uniform(k3, (inner_dim,), dtype, -bound, bound)
            self.bkv = jax.random.uniform(k4, (inner_dim * 2,), dtype, -bound, bound)
        else:
            self.bq = jnp.zeros((inner_dim,), dtype)
            self.bkv = jnp.zeros((inner_dim * 2,), dtype)

    def __call__(self, x, attn_kv=None):
        B_, N, C = x.shape
        heads = self.heads
        dh = C // heads  # matches PyTorch module (assumes inner_dim == C)

        if attn_kv is None:
            # q and kv share the same input -> one fused kernel, two outputs.
            x2d = x.reshape(B_ * N, C)
            q_flat, kv_flat = fused_qkv_projection(
                x2d, self.wq, self.bq, self.wkv, self.bkv,
                compute_dtype=self.compute_dtype)
            Nk = N
        else:
            q_flat = linear_projection(
                x.reshape(B_ * N, C), self.wq, self.bq,
                compute_dtype=self.compute_dtype)
            Bk, Nk, Ck = attn_kv.shape
            kv_flat = linear_projection(
                attn_kv.reshape(Bk * Nk, Ck), self.wkv, self.bkv,
                compute_dtype=self.compute_dtype)

        # Head split / permute (layout glue, stays in JAX) — mirrors the
        # PyTorch reshape(B_, N, {1,2}, heads, C//heads).permute(2,0,3,1,4).
        q = q_flat.reshape(B_, N, heads, dh).transpose(0, 2, 1, 3)
        kv = kv_flat.reshape(B_, Nk, 2, heads, dh).transpose(2, 0, 3, 1, 4)
        k, v = kv[0], kv[1]
        return q, k, v


# ---------------------------------------------------------------------------
# Plain-JAX reference (matches the PyTorch forward)
# ---------------------------------------------------------------------------
def _reference(x, mod: LinearProjectionPallas, attn_kv=None):
    B_, N, C = x.shape
    heads = mod.heads
    kv_in = x if attn_kv is None else attn_kv
    q = x @ mod.wq + mod.bq
    kv = kv_in @ mod.wkv + mod.bkv
    q = q.reshape(B_, N, 1, heads, C // heads).transpose(2, 0, 3, 1, 4)[0]
    kv = kv.reshape(B_, N, 2, heads, C // heads).transpose(2, 0, 3, 1, 4)
    return q, kv[0], kv[1]


if __name__ == "__main__":
    key = jax.random.PRNGKey(0)
    k_param, k_x, k_kv = jax.random.split(key, 3)

    B, N = 2, 8
    heads, dim_head = 4, 8
    dim = heads * dim_head  # 32 (module's reshape requires inner_dim == C)

    mod = LinearProjectionPallas(dim, heads=heads, dim_head=dim_head,
                                 bias=True, key=k_param)
    x = jax.random.normal(k_x, (B, N, dim), jnp.float32)
    akv = jax.random.normal(k_kv, (B, N, dim), jnp.float32)

    # --- self-attention path (fused q/kv kernel), f32 compute ---
    q, k, v = mod(x)
    jax.block_until_ready((q, k, v))
    q_ref, k_ref, v_ref = _reference(x, mod)
    assert q.shape == (B, heads, N, dim // heads)
    assert k.shape == (B, heads, N, dim // heads)
    assert v.shape == (B, heads, N, dim // heads)
    assert jnp.allclose(q, q_ref, atol=1e-5)
    assert jnp.allclose(k, k_ref, atol=1e-5)
    assert jnp.allclose(v, v_ref, atol=1e-5)

    # --- cross-attention path (separate q / kv kernels), f32 compute ---
    q2, k2, v2 = mod(x, attn_kv=akv)
    jax.block_until_ready((q2, k2, v2))
    q2_ref, k2_ref, v2_ref = _reference(x, mod, attn_kv=akv)
    assert jnp.allclose(q2, q2_ref, atol=1e-5)
    assert jnp.allclose(k2, k2_ref, atol=1e-5)
    assert jnp.allclose(v2, v2_ref, atol=1e-5)

    # --- bf16 input/weight path (f32 accumulation) — perf config for v5e/v6e/v7x ---
    mod_bf16 = LinearProjectionPallas(dim, heads=heads, dim_head=dim_head,
                                      bias=True, key=k_param,
                                      compute_dtype=jnp.bfloat16)
    qb, kb, vb = mod_bf16(x)
    jax.block_until_ready((qb, kb, vb))
    assert jnp.allclose(qb, q_ref, atol=1e-1, rtol=1e-2)
    assert jnp.allclose(kb, k_ref, atol=1e-1, rtol=1e-2)
    assert jnp.allclose(vb, v_ref, atol=1e-1, rtol=1e-2)

    print("KERNEL_OK")
</pallas_src>

<mosaic_0001>
module attributes {stable_mosaic.version = 11 : i64} {
  func.func @_fused_qkv_kernel(%arg0: i32, %arg1: memref<16x32xf32, #tpu.memory_space<vmem>>, %arg2: memref<32x32xf32, #tpu.memory_space<vmem>>, %arg3: memref<32x64xf32, #tpu.memory_space<vmem>>, %arg4: memref<1x32xf32, #tpu.memory_space<vmem>>, %arg5: memref<1x64xf32, #tpu.memory_space<vmem>>, %arg6: memref<16x32xf32, #tpu.memory_space<vmem>>, %arg7: memref<16x64xf32, #tpu.memory_space<vmem>>) attributes {dimension_semantics = [#tpu.dimension_semantics<parallel>], iteration_bounds = array<i64: 1>, scalar_prefetch = 0 : i64, scratch_operands = 0 : i64, tpu.core_type = #tpu.core_type<tc>, window_params = [{transform_indices = @transform_0, window_bounds = array<i64: 16, 32>}, {pipeline_mode = #tpu.pipeline_mode<synchronous>, transform_indices = @transform_1, window_bounds = array<i64: 32, 32>}, {pipeline_mode = #tpu.pipeline_mode<synchronous>, transform_indices = @transform_2, window_bounds = array<i64: 32, 64>}, {pipeline_mode = #tpu.pipeline_mode<synchronous>, transform_indices = @transform_3, window_bounds = array<i64: 1, 32>}, {pipeline_mode = #tpu.pipeline_mode<synchronous>, transform_indices = @transform_4, window_bounds = array<i64: 1, 64>}, {transform_indices = @transform_5, window_bounds = array<i64: 16, 32>}, {transform_indices = @transform_6, window_bounds = array<i64: 16, 64>}]} {
    %c0 = arith.constant 0 : index
    %c0_0 = arith.constant 0 : index
    %0 = vector.load %arg1[%c0, %c0_0] : memref<16x32xf32, #tpu.memory_space<vmem>>, vector<16x32xf32>
    %c0_1 = arith.constant 0 : index
    %c0_2 = arith.constant 0 : index
    %1 = vector.load %arg2[%c0_1, %c0_2] : memref<32x32xf32, #tpu.memory_space<vmem>>, vector<32x32xf32>
    %cst = arith.constant dense<0.000000e+00> : vector<16x32xf32>
    %2 = tpu.matmul %0, %1, %cst {dimension_numbers = #tpu.dot_dimension_numbers<[1], [0], [0], [1], [0, 0, 1, 1], [], []>} : vector<16x32xf32>, vector<32x32xf32>, vector<16x32xf32> -> vector<16x32xf32>
    %c0_3 = arith.constant 0 : index
    %c0_4 = arith.constant 0 : index
    %3 = vector.load %arg4[%c0_3, %c0_4] : memref<1x32xf32, #tpu.memory_space<vmem>>, vector<1x32xf32>
    %4 = vector.broadcast %3 : vector<1x32xf32> to vector<16x32xf32>
    %5 = arith.addf %2, %4 : vector<16x32xf32>
    %c0_5 = arith.constant 0 : index
    %c0_6 = arith.constant 0 : index
    %6 = vector.load %arg6[%c0_5, %c0_6] : memref<16x32xf32, #tpu.memory_space<vmem>>, vector<16x32xf32>
    tpu.vector_store %arg6[%c0_5, %c0_6], %5 {strides = array<i32>} : memref<16x32xf32, #tpu.memory_space<vmem>>, vector<16x32xf32>,
    %c0_7 = arith.constant 0 : index
    %c0_8 = arith.constant 0 : index
    %7 = vector.load %arg3[%c0_7, %c0_8] : memref<32x64xf32, #tpu.memory_space<vmem>>, vector<32x64xf32>
    %cst_9 = arith.constant dense<0.000000e+00> : vector<16x64xf32>
    %8 = tpu.matmul %0, %7, %cst_9 {dimension_numbers = #tpu.dot_dimension_numbers<[1], [0], [0], [1], [0, 0, 1, 1], [], []>} : vector<16x32xf32>, vector<32x64xf32>, vector<16x64xf32> -> vector<16x64xf32>
    %c0_10 = arith.constant 0 : index
    %c0_11 = arith.constant 0 : index
    %9 = vector.load %arg5[%c0_10, %c0_11] : memref<1x64xf32, #tpu.memory_space<vmem>>, vector<1x64xf32>
    %10 = vector.broadcast %9 : vector<1x64xf32> to vector<16x64xf32>
    %11 = arith.addf %8, %10 : vector<16x64xf32>
    %c0_12 = arith.constant 0 : index
    %c0_13 = arith.constant 0 : index
    %12 = vector.load %arg7[%c0_12, %c0_13] : memref<16x64xf32, #tpu.memory_space<vmem>>, vector<16x64xf32>
    tpu.vector_store %arg7[%c0_12, %c0_13], %11 {strides = array<i32>} : memref<16x64xf32, #tpu.memory_space<vmem>>, vector<16x64xf32>,
    return
  }
  func.func @transform_0(%arg0: i32) -> (i32, i32) {
    %c0_i32 = arith.constant 0 : i32
    %c0_i32_0 = arith.constant 0 : i32
    return %arg0, %c0_i32 : i32, i32
  }
  func.func @transform_1(%arg0: i32) -> (i32, i32) {
    %c0_i32 = arith.constant 0 : i32
    %c0_i32_0 = arith.constant 0 : i32
    %c0_i32_1 = arith.constant 0 : i32
    return %c0_i32, %c0_i32_0 : i32, i32
  }
  func.func @transform_2(%arg0: i32) -> (i32, i32) {
    %c0_i32 = arith.constant 0 : i32
    %c0_i32_0 = arith.constant 0 : i32
    %c0_i32_1 = arith.constant 0 : i32
    return %c0_i32, %c0_i32_0 : i32, i32
  }
  func.func @transform_3(%arg0: i32) -> (i32, i32) {
    %c0_i32 = arith.constant 0 : i32
    %c0_i32_0 = arith.constant 0 : i32
    %c0_i32_1 = arith.constant 0 : i32
    return %c0_i32, %c0_i32_0 : i32, i32
  }
  func.func @transform_4(%arg0: i32) -> (i32, i32) {
    %c0_i32 = arith.constant 0 : i32
    %c0_i32_0 = arith.constant 0 : i32
    %c0_i32_1 = arith.constant 0 : i32
    return %c0_i32, %c0_i32_0 : i32, i32
  }
  func.func @transform_5(%arg0: i32) -> (i32, i32) {
    %c0_i32 = arith.constant 0 : i32
    %c0_i32_0 = arith.constant 0 : i32
    return %arg0, %c0_i32 : i32, i32
  }
  func.func @transform_6(%arg0: i32) -> (i32, i32) {
    %c0_i32 = arith.constant 0 : i32
    %c0_i32_0 = arith.constant 0 : i32
    return %arg0, %c0_i32 : i32, i32
  }
}

</mosaic_0001>

<llo_original>
// kernel: tpu_custom_call.1
$region0: #{tpu_custom_call.1}
  #allocation0 [shape = 'u32[]', space=smem, size = 0x4, offset = 0x4, fixed_abs, tag = 'smem constant byte address 0x4 - core index']
  #allocation1 [shape = 'u32[144,128]{1,0:T(1,128)}', space=vmem, size = 0x12000, scoped, tag = 'internal scratch']
  %s0 = inlined_call_operand.hbm [shape: f32[16,32], index: 0, kind: input, shape index: {}]
  %s1 = inlined_call_operand.hbm [shape: f32[32,32], index: 1, kind: input, shape index: {}]
  %s2 = inlined_call_operand.hbm [shape: f32[32,64], index: 2, kind: input, shape index: {}]
  %s3 = inlined_call_operand.vmem [shape: f32[1,32], index: 3, kind: input, shape index: {}]
  %s4 = inlined_call_operand.vmem [shape: f32[1,64], index: 4, kind: input, shape index: {}]
  %s5 = inlined_call_operand.hbm [shape: f32[16,32], index: 5, kind: output, shape index: {0}]
  %s6 = inlined_call_operand.hbm [shape: f32[16,64], index: 6, kind: output, shape index: {1}]
  %7 = xla_tuple %s5, %s6
  %s8 = sld [smem:[#allocation0]]
  $region50: #{tpu_custom_call.1} parent=0
    _
  %s10 = ssub.s32 1, %s8
  %s11 = scalar_select 0, %s10, %s8
  $region1: #{tpu_custom_call.1} parent=0
    #allocation2 [shape = 'u8[8192]{0}', space=vmem, size = 0x2000, scoped, tag = 'input window, operand 0, single buffered']
    #allocation3 [shape = 's32[1]{0}', space=sflag, size = 0x4, scoped, tag = 'scoped memory for tpu_custom_call.1']
    #allocation4 [shape = 's32[1]{0}', space=sflag, size = 0x4, scoped, tag = 'scoped memory for tpu_custom_call.1']
    #allocation5 [shape = 'u8[16384]{0}', space=vmem, size = 0x4000, scoped, tag = 'input window, operand 1, single buffered']
    #allocation6 [shape = 's32[1]{0}', space=sflag, size = 0x4, scoped, tag = 'scoped memory for tpu_custom_call.1']
    #allocation7 [shape = 'u8[16384]{0}', space=vmem, size = 0x4000, scoped, tag = 'input window, operand 2, single buffered']
    #allocation8 [shape = 'u8[8192]{0}', space=vmem, size = 0x2000, scoped, tag = 'output window, operand 0, single buffered']
    #allocation9 [shape = 'u8[8192]{0}', space=vmem, size = 0x2000, scoped, tag = 'output window, operand 1, single buffered']
    #allocation10 [shape = 's32[1]{0}', space=sflag, size = 0x4, scoped, tag = 'scoped memory for tpu_custom_call.1']
    %12 = vsyncpa [#allocation3], 0
    %13 = vsyncpa [#allocation6], 0
    %14 = vsyncpa [#allocation4], 0
    %15 = vsyncpa [#allocation10], 0
    // Predicated region
    $region2: #{tpu_custom_call.1} parent=1 // pred_check
      _
    $region3: #{tpu_custom_call.1} parent=1 // pred_check_branch
      %17 = sbr.rel (0) target = $region5
    $region4: #{tpu_custom_call.1} parent=1 // pred_region
      %s19 = ssub.s32 256, 256
      %20 = vsyncadd [#allocation3], %s19
      %s21 = sshll.u32 [#allocation2], 4
      %s22 = int_to_ptr.vmem [resolvable:$true] %s21
      %27 = dma.hbm_to_vmem [thread:$0]  %s0, 256, %s22, [#allocation3], 128, 128, 8
    $region5: #{tpu_custom_call.1} parent=1 // pred_fallthru
      _
    // Predicated region
    $region6: #{tpu_custom_call.1} parent=1 // pred_check
      _
    $region7: #{tpu_custom_call.1} parent=1 // pred_check_branch
      %29 = sbr.rel (0) target = $region9
    $region8: #{tpu_custom_call.1} parent=1 // pred_region
      %s31 = ssub.s32 512, 512
      %32 = vsyncadd [#allocation6], %s31
      %s33 = sshll.u32 [#allocation5], 4
      %s34 = int_to_ptr.vmem [resolvable:$true] %s33
      %39 = dma.hbm_to_vmem [thread:$0]  %s1, 512, %s34, [#allocation6], 128, 128, 8
    $region9: #{tpu_custom_call.1} parent=1 // pred_fallthru
      _
    // Predicated region
    $region10: #{tpu_custom_call.1} parent=1 // pred_check
      _
    $region11: #{tpu_custom_call.1} parent=1 // pred_check_branch
      %41 = sbr.rel (0) target = $region13
    $region12: #{tpu_custom_call.1} parent=1 // pred_region
      %s43 = ssub.s32 512, 512
      %44 = vsyncadd [#allocation6], %s43
      %s45 = sshll.u32 [#allocation7], 4
      %s46 = int_to_ptr.vmem [resolvable:$true] %s45
      %51 = dma.hbm_to_vmem [thread:$0]  %s2, 512, %s46, [#allocation6], 128, 128, 8
    $region13: #{tpu_custom_call.1} parent=1 // pred_fallthru
      _
    // Predicated region
    $region14: #{tpu_custom_call.1} parent=1 // pred_check
      _
    $region15: #{tpu_custom_call.1} parent=1 // pred_check_branch
      %53 = sbr.rel (0) target = $region17
    $region16: #{tpu_custom_call.1} parent=1 // pred_region
      _
    $region17: #{tpu_custom_call.1} parent=1 // pred_fallthru
      _
    // Predicated region
    $region18: #{tpu_custom_call.1} parent=1 // pred_check
      _
    $region19: #{tpu_custom_call.1} parent=1 // pred_check_branch
      %55 = sbr.rel (0) target = $region21
    $region20: #{tpu_custom_call.1} parent=1 // pred_region
      _
    $region21: #{tpu_custom_call.1} parent=1 // pred_fallthru
      _
    // Predicated region
    $region22: #{tpu_custom_call.1} parent=1 // pred_check
      _
    $region23: #{tpu_custom_call.1} parent=1 // pred_check_branch
      %57 = sbr.rel (0) target = $region25
    $region24: #{tpu_custom_call.1} parent=1 // pred_region
      %58 = dma.done [#allocation3], 256
    $region25: #{tpu_custom_call.1} parent=1 // pred_fallthru
      _
    // Predicated region
    $region26: #{tpu_custom_call.1} parent=1 // pred_check
      _
    $region27: #{tpu_custom_call.1} parent=1 // pred_check_branch
      %60 = sbr.rel (0) target = $region29
    $region28: #{tpu_custom_call.1} parent=1 // pred_region
      %61 = dma.done [#allocation6], 512
    $region29: #{tpu_custom_call.1} parent=1 // pred_fallthru
      _
    // Predicated region
    $region30: #{tpu_custom_call.1} parent=1 // pred_check
      _
    $region31: #{tpu_custom_call.1} parent=1 // pred_check_branch
      %63 = sbr.rel (0) target = $region33
    $region32: #{tpu_custom_call.1} parent=1 // pred_region
      %64 = dma.done [#allocation6], 512
    $region33: #{tpu_custom_call.1} parent=1 // pred_fallthru
      _
    %v65 = vld [vmem:[#allocation2] sm:$0xff]
    %v66 = vld [vmem:[#allocation2 + $0x8] sm:$0xff]
    %v67 = vld [vmem:[#allocation5] sm:$0xff]
    %v68 = vld [vmem:[#allocation5 + $0x8] sm:$0xff]
    %v69 = vld [vmem:[#allocation5 + $0x10] sm:$0xff]
    %v70 = vld [vmem:[#allocation5 + $0x18] sm:$0xff]
    %v71 = vld [vmem:[%s3] sm:$0x1]
    %v73 = vlaneseq
    %v74 = vshrl.u32 %v73, 7
    %v75 = vsub.s32 0, %v74
    %v76 = vrot.slane %v71, %v75
    %vm78 = vcmask 261120
    %v80 = vsel %vm78, %v65, 0
    %v83 = vsel %vm78, %v66, 0
    %85 = vmatprep.subr.mxu0 0.0
    %86 = vmatpush1.msra.mxu0 0.0
    %87 = vmatprep.subr.mxu0 0.0
    %88 = vmatpush1.msra.mxu0 0.0
    %89 = vmatprep.subr.mxu0 0.0
    %90 = vmatpush1.msra.mxu0 0.0
    %91 = vmatprep.subr.mxu0 0.0
    %92 = vmatpush1.msra.mxu0 0.0
    %93 = vmatprep.subr.mxu0 0.0
    %94 = vmatpush1.msra.mxu0 0.0
    %95 = vmatprep.subr.mxu0 0.0
    %96 = vmatpush1.msra.mxu0 0.0
    %97 = vmatprep.subr.mxu0 0.0
    %98 = vmatpush1.msra.mxu0 0.0
    %99 = vmatprep.subr.mxu0 0.0
    %100 = vmatpush1.msra.mxu0 0.0
    %101 = vmatprep.subr.mxu0 0.0
    %102 = vmatpush1.msra.mxu0 0.0
    %103 = vmatprep.subr.mxu0 0.0
    %104 = vmatpush1.msra.mxu0 0.0
    %105 = vmatprep.subr.mxu0 0.0
    %106 = vmatpush1.msra.mxu0 0.0
    %107 = vmatprep.subr.mxu0 0.0
    %108 = vmatpush1.msra.mxu0 0.0
    %109 = vmatprep.subr.mxu0 0.0
    %110 = vmatpush1.msra.mxu0 %v70
    %111 = vmatprep.subr.mxu0 0.0
    %112 = vmatpush1.msra.mxu0 %v69
    %113 = vmatprep.subr.mxu0 0.0
    %114 = vmatpush1.msra.mxu0 %v68
    %115 = vmatprep.subr.mxu0 0.0
    %116 = vmatpush1.msra.mxu0 %v67
    %117 = vmatprep.subr.mxu0 0.0
    %118 = vmatpush2.msra.mxu0 0.0
    %119 = vmatprep.subr.mxu0 0.0
    %120 = vmatpush2.msra.mxu0 0.0
    %121 = vmatprep.subr.mxu0 0.0
    %122 = vmatpush2.msra.mxu0 0.0
    %123 = vmatprep.subr.mxu0 0.0
    %124 = vmatpush2.msra.mxu0 0.0
    %125 = vmatprep.subr.mxu0 0.0
    %126 = vmatpush2.msra.mxu0 0.0
    %127 = vmatprep.subr.mxu0 0.0
    %128 = vmatpush2.msra.mxu0 0.0
    %129 = vmatprep.subr.mxu0 0.0
    %130 = vmatpush2.msra.mxu0 0.0
    %131 = vmatprep.subr.mxu0 0.0
    %132 = vmatpush2.msra.mxu0 0.0
    %133 = vmatprep.subr.mxu0 0.0
    %134 = vmatpush2.msra.mxu0 0.0
    %135 = vmatprep.subr.mxu0 0.0
    %136 = vmatpush2.msra.mxu0 0.0
    %137 = vmatprep.subr.mxu0 0.0
    %138 = vmatpush2.msra.mxu0 0.0
    %139 = vmatprep.subr.mxu0 0.0
    %140 = vmatpush2.msra.mxu0 0.0
    %141 = vmatprep.subr.mxu0 0.0
    %142 = vmatpush2.msra.mxu0 0.0
    %143 = vmatprep.subr.mxu0 0.0
    %144 = vmatpush2.msra.mxu0 0.0
    %145 = vmatprep.subr.mxu0 0.0
    %146 = vmatpush2.msra.mxu0 0.0
    %147 = vmatprep.subr.mxu0 0.0
    %148 = vmatpush2.msra.mxu0 0.0
    %149 = vmatprep.mubr.f32.mxu0 0.0
    %150 = vmatmul.mubr.f32.gmra.mxu0 %v80
    %v151 = vpop.f32.mrf.mxu0
    %v152 = vadd.f32 %v76, %v151
    %v153 = vpop.f32.mrf.mxu0
    %154 = vmatprep.mubr.f32.mxu0 0.0
    %155 = vmatmul.mubr.f32.gmra.mxu0 %v83
    %v156 = vpop.f32.mrf.mxu0
    %v157 = vadd.f32 %v76, %v156
    %v158 = vpop.f32.mrf.mxu0
    %159 = vdwg.mxu0
    %160 = vst.msk [vmem:[#allocation8] sm:$0xff] %vm78, %v152
    %161 = vst.msk [vmem:[#allocation8 + $0x8] sm:$0xff] %vm78, %v157
    %v162 = vld [vmem:[#allocation7] sm:$0xff]
    %v163 = vld [vmem:[#allocation7 + $0x8] sm:$0xff]
    %v164 = vld [vmem:[#allocation7 + $0x10] sm:$0xff]
    %v165 = vld [vmem:[#allocation7 + $0x18] sm:$0xff]
    %v166 = vld [vmem:[%s4] sm:$0x1]
    %v168 = vlaneseq
    %v169 = vshrl.u32 %v168, 7
    %v170 = vsub.s32 0, %v169
    %v171 = vrot.slane %v166, %v170
    %173 = vmatprep.subr.mxu0 0.0
    %174 = vmatpush1.msra.mxu0 0.0
    %175 = vmatprep.subr.mxu0 0.0
    %176 = vmatpush1.msra.mxu0 0.0
    %177 = vmatprep.subr.mxu0 0.0
    %178 = vmatpush1.msra.mxu0 0.0
    %179 = vmatprep.subr.mxu0 0.0
    %180 = vmatpush1.msra.mxu0 0.0
    %181 = vmatprep.subr.mxu0 0.0
    %182 = vmatpush1.msra.mxu0 0.0
    %183 = vmatprep.subr.mxu0 0.0
    %184 = vmatpush1.msra.mxu0 0.0
    %185 = vmatprep.subr.mxu0 0.0
    %186 = vmatpush1.msra.mxu0 0.0
    %187 = vmatprep.subr.mxu0 0.0
    %188 = vmatpush1.msra.mxu0 0.0
    %189 = vmatprep.subr.mxu0 0.0
    %190 = vmatpush1.msra.mxu0 0.0
    %191 = vmatprep.subr.mxu0 0.0
    %192 = vmatpush1.msra.mxu0 0.0
    %193 = vmatprep.subr.mxu0 0.0
    %194 = vmatpush1.msra.mxu0 0.0
    %195 = vmatprep.subr.mxu0 0.0
    %196 = vmatpush1.msra.mxu0 0.0
    %197 = vmatprep.subr.mxu0 0.0
    %198 = vmatpush1.msra.mxu0 %v165
    %199 = vmatprep.subr.mxu0 0.0
    %200 = vmatpush1.msra.mxu0 %v164
    %201 = vmatprep.subr.mxu0 0.0
    %202 = vmatpush1.msra.mxu0 %v163
    %203 = vmatprep.subr.mxu0 0.0
    %204 = vmatpush1.msra.mxu0 %v162
    %205 = vmatprep.subr.mxu0 0.0
    %206 = vmatpush2.msra.mxu0 0.0
    %207 = vmatprep.subr.mxu0 0.0
    %208 = vmatpush2.msra.mxu0 0.0
    %209 = vmatprep.subr.mxu0 0.0
    %210 = vmatpush2.msra.mxu0 0.0
    %211 = vmatprep.subr.mxu0 0.0
    %212 = vmatpush2.msra.mxu0 0.0
    %213 = vmatprep.subr.mxu0 0.0
    %214 = vmatpush2.msra.mxu0 0.0
    %215 = vmatprep.subr.mxu0 0.0
    %216 = vmatpush2.msra.mxu0 0.0
    %217 = vmatprep.subr.mxu0 0.0
    %218 = vmatpush2.msra.mxu0 0.0
    %219 = vmatprep.subr.mxu0 0.0
    %220 = vmatpush2.msra.mxu0 0.0
    %221 = vmatprep.subr.mxu0 0.0
    %222 = vmatpush2.msra.mxu0 0.0
    %223 = vmatprep.subr.mxu0 0.0
    %224 = vmatpush2.msra.mxu0 0.0
    %225 = vmatprep.subr.mxu0 0.0
    %226 = vmatpush2.msra.mxu0 0.0
    %227 = vmatprep.subr.mxu0 0.0
    %228 = vmatpush2.msra.mxu0 0.0
    %229 = vmatprep.subr.mxu0 0.0
    %230 = vmatpush2.msra.mxu0 0.0
    %231 = vmatprep.subr.mxu0 0.0
    %232 = vmatpush2.msra.mxu0 0.0
    %233 = vmatprep.subr.mxu0 0.0
    %234 = vmatpush2.msra.mxu0 0.0
    %235 = vmatprep.subr.mxu0 0.0
    %236 = vmatpush2.msra.mxu0 0.0
    %237 = vmatprep.mubr.f32.mxu0 0.0
    %238 = vmatmul.mubr.f32.gmra.mxu0 %v80
    %v239 = vpop.f32.mrf.mxu0
    %v240 = vadd.f32 %v171, %v239
    %v241 = vpop.f32.mrf.mxu0
    %242 = vmatprep.mubr.f32.mxu0 0.0
    %243 = vmatmul.mubr.f32.gmra.mxu0 %v83
    %v244 = vpop.f32.mrf.mxu0
    %v245 = vadd.f32 %v171, %v244
    %v246 = vpop.f32.mrf.mxu0
    %247 = vdwg.mxu0
    %vm248 = vcmask 523264
    %249 = vst.msk [vmem:[#allocation9] sm:$0xff] %vm248, %v240
    %250 = vst.msk [vmem:[#allocation9 + $0x8] sm:$0xff] %vm248, %v245
    // Predicated region
    $region34: #{tpu_custom_call.1} parent=1 // pred_check
      _
    $region35: #{tpu_custom_call.1} parent=1 // pred_check_branch
      %252 = sbr.rel (0) target = $region37
    $region36: #{tpu_custom_call.1} parent=1 // pred_region
      %s254 = ssub.s32 256, 256
      %255 = vsyncadd [#allocation4], %s254
      %s256 = sshll.u32 [#allocation8], 4
      %s257 = int_to_ptr.vmem [resolvable:$true] %s256
      %262 = dma.vmem_to_hbm [thread:$0]  %s257, 256, %s5, [#allocation4], 128, 128, 8
    $region37: #{tpu_custom_call.1} parent=1 // pred_fallthru
      _
    // Predicated region
    $region38: #{tpu_custom_call.1} parent=1 // pred_check
      _
    $region39: #{tpu_custom_call.1} parent=1 // pred_check_branch
      %264 = sbr.rel (0) target = $region41
    $region40: #{tpu_custom_call.1} parent=1 // pred_region
      %s266 = ssub.s32 256, 256
      %267 = vsyncadd [#allocation10], %s266
      %s268 = sshll.u32 [#allocation9], 4
      %s269 = int_to_ptr.vmem [resolvable:$true] %s268
      %274 = dma.vmem_to_hbm [thread:$0]  %s269, 256, %s6, [#allocation10], 128, 128, 8
    $region41: #{tpu_custom_call.1} parent=1 // pred_fallthru
      _
    // Predicated region
    $region42: #{tpu_custom_call.1} parent=1 // pred_check
      _
    $region43: #{tpu_custom_call.1} parent=1 // pred_check_branch
      %276 = sbr.rel (0) target = $region45
    $region44: #{tpu_custom_call.1} parent=1 // pred_region
      %277 = dma.done [#allocation4], 256
    $region45: #{tpu_custom_call.1} parent=1 // pred_fallthru
      _
    // Predicated region
    $region46: #{tpu_custom_call.1} parent=1 // pred_check
      _
    $region47: #{tpu_custom_call.1} parent=1 // pred_check_branch
      %279 = sbr.rel (0) target = $region49
    $region48: #{tpu_custom_call.1} parent=1 // pred_region
      %280 = dma.done [#allocation10], 256
    $region49: #{tpu_custom_call.1} parent=1 // pred_fallthru
      _
    %281 = vsyncpa [#allocation3], 1
    %282 = vsyncpa [#allocation6], 1
    %283 = vsyncpa [#allocation4], 1
    %284 = vsyncpa [#allocation10], 1

</llo_original>
